<compile_context>
chip_gen: v7x
topology: tpu7x:2x2x1
jax: 0.10.0
libtpu: 0.0.40
codegen_flags: <defaults>
</compile_context>

<pallas_src>
import jax
import jax.numpy as jnp
from jax.experimental import pallas as pl
from jax.experimental.pallas import tpu as pltpu


def _relu(v):
    return jnp.maximum(v, 0.0)


def _round_up(v, m):
    return (v + m - 1) // m * m


# -----------------------------------------------------------------------------
# Kernel factory: fused  (A_tile @ x_full) -> fc_hidden -> skip / gate epilogue
# -----------------------------------------------------------------------------
def _make_graph_conv_kernel(using_sc, has_proj, act_fn):
    def kernel(*refs):
        a_ref, xf_ref, wh_ref, bh_ref = refs[0], refs[1], refs[2], refs[3]
        o_ref = refs[-1]
        idx = 4
        if using_sc != "no":
            xr_ref = refs[idx]
            idx += 1
            if has_proj:
                wsc_ref, bsc_ref = refs[idx], refs[idx + 1]
                idx += 2
            if using_sc == "gsc":
                w1_ref, b1_ref, w2_ref, b2_ref = refs[idx:idx + 4]

        # Neighborhood aggregation (bmm row-tile) on the MXU, f32 accumulation.
        x_new = jnp.dot(a_ref[...], xf_ref[...],
                        preferred_element_type=jnp.float32)
        # fc_hidden: weight is already [in, out] -> direct MXU contraction.
        h = jnp.dot(x_new.astype(wh_ref.dtype), wh_ref[...],
                    preferred_element_type=jnp.float32) + bh_ref[...]

        if using_sc == "no":
            o_ref[...] = act_fn(h).astype(o_ref.dtype)
            return

        # Skip / gate path uses this tile's rows of the ORIGINAL x.
        if has_proj:
            xs = jnp.dot(xr_ref[...], wsc_ref[...],
                         preferred_element_type=jnp.float32) + bsc_ref[...]
        else:
            xs = xr_ref[...].astype(jnp.float32)  # no-op cast for f32 inputs

        if using_sc == "sc":
            o_ref[...] = act_fn(h + xs).astype(o_ref.dtype)
        else:  # 'gsc'
            g = jnp.dot(xs.astype(w1_ref.dtype), w1_ref[...],
                        preferred_element_type=jnp.float32) + b1_ref[...]
            g = g + jnp.dot(h.astype(w2_ref.dtype), w2_ref[...],
                            preferred_element_type=jnp.float32) + b2_ref[...]
            gate = jax.nn.sigmoid(g)
            o_ref[...] = (h * gate + xs * (1.0 - gate)).astype(o_ref.dtype)

    return kernel


# -----------------------------------------------------------------------------
# One-time parameter preparation (outside the hot path)
# -----------------------------------------------------------------------------
def prepare_params(torch_params, using_sc, input_dim, hidden_dim):
    """Convert nn.Linear-layout params once: weight [out, in] -> [in, out]
    (MXU consumes it directly, no per-call transpose), bias -> (1, out)."""
    def cvt(w, b):
        return jnp.asarray(w).T, jnp.asarray(b).reshape(1, -1)

    p = {}
    p["w_h"], p["b_h"] = cvt(torch_params["w_h"], torch_params["b_h"])
    if using_sc != "no" and input_dim != hidden_dim:
        p["w_sc"], p["b_sc"] = cvt(torch_params["w_sc"], torch_params["b_sc"])
    if using_sc == "gsc":
        p["w_1"], p["b_1"] = cvt(torch_params["w_1"], torch_params["b_1"])
        p["w_2"], p["b_2"] = cvt(torch_params["w_2"], torch_params["b_2"])
    return p


# -----------------------------------------------------------------------------
# Wrapper: padding / tiling / pallas_call
# -----------------------------------------------------------------------------
def graph_conv(x, A, params, using_sc="sc", *, act_fn=_relu, tile_n=128,
               vmem_limit_bytes=32 * 1024 * 1024):
    """Pallas implementation of Graph_Conv.forward((x, A)) -> (out, A).

    x: [B, N, input_dim], A: [B, N, N]
    params: output of prepare_params ([in, out] weights, (1, out) biases).
    """
    assert using_sc in ("no", "sc", "gsc")
    B, N, d_in = x.shape
    d_hid = params["w_h"].shape[1]
    has_proj = d_in != d_hid
    dtype = x.dtype
    itemsize = jnp.dtype(dtype).itemsize

    # ---- alignment / tiling --------------------------------------------------
    sublane = 8 if itemsize >= 4 else 16          # f32 -> 8, bf16 -> 16
    d_in_p = _round_up(d_in, 128)                 # lane-dense MXU contraction
    d_hid_p = _round_up(d_hid, 128)               # lane-dense (unmasked) output stores
    tn = min(_round_up(tile_n, sublane), _round_up(N, sublane))
    n_p = _round_up(N, tn)

    def pad3(a, s1, s2):
        if a.shape[1] == s1 and a.shape[2] == s2:
            return a
        return jnp.pad(a, ((0, 0), (0, s1 - a.shape[1]), (0, s2 - a.shape[2])))

    def pad2(a, s0, s1):
        if a.shape == (s0, s1):
            return a
        return jnp.pad(a, ((0, s0 - a.shape[0]), (0, s1 - a.shape[1])))

    x_p = pad3(x, n_p, d_in_p)
    a_p = pad3(A, n_p, n_p)

    # ---- specs / operands ----------------------------------------------------
    in_specs = [
        pl.BlockSpec((None, tn, n_p), lambda b, i: (b, i, 0)),       # A row tile
        pl.BlockSpec((None, n_p, d_in_p), lambda b, i: (b, 0, 0)),   # full x per batch
        pl.BlockSpec((d_in_p, d_hid_p), lambda b, i: (0, 0)),        # W_hidden [in,out]
        pl.BlockSpec((1, d_hid_p), lambda b, i: (0, 0)),             # b_hidden
    ]
    operands = [a_p, x_p, pad2(params["w_h"], d_in_p, d_hid_p),
                pad2(params["b_h"], 1, d_hid_p)]

    if using_sc != "no":
        # this tile's rows of x for the skip / gate path
        in_specs.append(pl.BlockSpec((None, tn, d_in_p), lambda b, i: (b, i, 0)))
        operands.append(x_p)
        if has_proj:
            in_specs += [pl.BlockSpec((d_in_p, d_hid_p), lambda b, i: (0, 0)),
                         pl.BlockSpec((1, d_hid_p), lambda b, i: (0, 0))]
            operands += [pad2(params["w_sc"], d_in_p, d_hid_p),
                         pad2(params["b_sc"], 1, d_hid_p)]
        if using_sc == "gsc":
            in_specs += [pl.BlockSpec((d_hid_p, d_hid_p), lambda b, i: (0, 0)),
                         pl.BlockSpec((1, d_hid_p), lambda b, i: (0, 0)),
                         pl.BlockSpec((d_hid_p, d_hid_p), lambda b, i: (0, 0)),
                         pl.BlockSpec((1, d_hid_p), lambda b, i: (0, 0))]
            operands += [pad2(params["w_1"], d_hid_p, d_hid_p),
                         pad2(params["b_1"], 1, d_hid_p),
                         pad2(params["w_2"], d_hid_p, d_hid_p),
                         pad2(params["b_2"], 1, d_hid_p)]

    out_spec = pl.BlockSpec((None, tn, d_hid_p), lambda b, i: (b, i, 0))

    # ---- advisory cost estimate ---------------------------------------------
    flops = 2 * B * N * N * d_in + 2 * B * N * d_in * d_hid
    transcendentals = 0
    if using_sc != "no" and has_proj:
        flops += 2 * B * N * d_in * d_hid
    if using_sc == "gsc":
        flops += 2 * 2 * B * N * d_hid * d_hid
        transcendentals = B * N * d_hid
    bytes_accessed = sum(int(o.size) * itemsize for o in operands) \
        + B * N * d_hid * itemsize
    cost = pl.CostEstimate(flops=int(flops),
                           transcendentals=int(transcendentals),
                           bytes_accessed=int(bytes_accessed))

    # TODO(synk): for very large N (A row-tile + full x no longer fit VMEM), add a
    # third "arbitrary" grid axis over the neighbor dim with an f32 VMEM accumulator.
    kernel = _make_graph_conv_kernel(using_sc, has_proj, act_fn)
    out = pl.pallas_call(
        kernel,
        grid=(B, n_p // tn),
        in_specs=in_specs,
        out_specs=out_spec,
        out_shape=jax.ShapeDtypeStruct((B, n_p, d_hid_p), dtype),
        compiler_params=pltpu.CompilerParams(
            dimension_semantics=("parallel", "parallel"),
            vmem_limit_bytes=vmem_limit_bytes,
        ),
        cost_estimate=cost,
    )(*operands)

    if (n_p, d_hid_p) != (N, d_hid):
        out = out[:, :N, :d_hid]
    return out, A


# -----------------------------------------------------------------------------
# Pure-JAX reference (matches the PyTorch forward)
# -----------------------------------------------------------------------------
def _reference(x, A, params, using_sc):
    hp = jax.lax.Precision.HIGHEST
    x_new = jnp.einsum("bij,bjd->bid", A, x, precision=hp)
    h = jnp.einsum("bid,dh->bih", x_new, params["w_h"], precision=hp) + params["b_h"]
    if using_sc == "no":
        return jnp.maximum(h, 0.0)
    if "w_sc" in params:
        xs = jnp.einsum("bid,dh->bih", x, params["w_sc"], precision=hp) + params["b_sc"]
    else:
        xs = x
    if using_sc == "sc":
        return jnp.maximum(h + xs, 0.0)
    g = (jnp.einsum("bih,hk->bik", xs, params["w_1"], precision=hp) + params["b_1"]
         + jnp.einsum("bih,hk->bik", h, params["w_2"], precision=hp) + params["b_2"])
    gate = jax.nn.sigmoid(g)
    return h * gate + xs * (1.0 - gate)


if __name__ == "__main__":
    key = jax.random.PRNGKey(0)
    B, N, D_IN, D_HID = 2, 128, 128, 256

    ks = jax.random.split(key, 16)
    x = jax.random.normal(ks[0], (B, N, D_IN), dtype=jnp.float32)
    A = jax.random.uniform(ks[1], (B, N, N), dtype=jnp.float32)
    A = A / jnp.sum(A, axis=-1, keepdims=True)        # row-normalized adjacency

    def linear_init(kw, kb, out_dim, in_dim):
        bound = 1.0 / (in_dim ** 0.5)
        w = jax.random.uniform(kw, (out_dim, in_dim), jnp.float32, -bound, bound)
        b = jax.random.uniform(kb, (out_dim,), jnp.float32, -bound, bound)
        return w, b

    # PyTorch-layout params ([out, in] weights), converted once by prepare_params.
    torch_params = {}
    torch_params["w_h"], torch_params["b_h"] = linear_init(ks[2], ks[3], D_HID, D_IN)
    torch_params["w_sc"], torch_params["b_sc"] = linear_init(ks[4], ks[5], D_HID, D_IN)
    torch_params["w_1"], torch_params["b_1"] = linear_init(ks[6], ks[7], D_HID, D_HID)
    torch_params["w_2"], torch_params["b_2"] = linear_init(ks[8], ks[9], D_HID, D_HID)

    for mode in ("sc", "gsc", "no"):
        p = prepare_params(torch_params, mode, D_IN, D_HID)
        out, a_out = graph_conv(x, A, p, using_sc=mode)
        jax.block_until_ready(out)
        ref = _reference(x, A, p, mode)
        err = float(jnp.max(jnp.abs(out - ref)))
        assert jnp.allclose(out, ref, atol=2e-2, rtol=2e-2), \
            f"mode={mode}: mismatch, max abs err={err}"

    # identity-skip case: input_dim == hidden_dim -> no fc_1 inside the skip
    tp_id = {}
    tp_id["w_h"], tp_id["b_h"] = linear_init(ks[10], ks[11], D_IN, D_IN)
    p_id = prepare_params(tp_id, "sc", D_IN, D_IN)
    out_id, _ = graph_conv(x, A, p_id, using_sc="sc")
    jax.block_until_ready(out_id)
    ref_id = _reference(x, A, p_id, "sc")
    assert jnp.allclose(out_id, ref_id, atol=2e-2, rtol=2e-2), "identity skip mismatch"

    print("KERNEL_OK")
</pallas_src>

<mosaic_0001>
module attributes {stable_mosaic.version = 11 : i64} {
  func.func @kernel(%arg0: i32, %arg1: i32, %arg2: memref<1x128x128xf32, #tpu.memory_space<vmem>>, %arg3: memref<1x128x128xf32, #tpu.memory_space<vmem>>, %arg4: memref<128x256xf32, #tpu.memory_space<vmem>>, %arg5: memref<1x256xf32, #tpu.memory_space<vmem>>, %arg6: memref<1x128x128xf32, #tpu.memory_space<vmem>>, %arg7: memref<128x256xf32, #tpu.memory_space<vmem>>, %arg8: memref<1x256xf32, #tpu.memory_space<vmem>>, %arg9: memref<1x128x256xf32, #tpu.memory_space<vmem>>) attributes {dimension_semantics = [#tpu.dimension_semantics<parallel>, #tpu.dimension_semantics<parallel>], iteration_bounds = array<i64: 2, 1>, scalar_prefetch = 0 : i64, scratch_operands = 0 : i64, tpu.core_type = #tpu.core_type<tc>, window_params = [{transform_indices = @transform_0, window_bounds = array<i64: 1, 128, 128>}, {transform_indices = @transform_1, window_bounds = array<i64: 1, 128, 128>}, {pipeline_mode = #tpu.pipeline_mode<synchronous>, transform_indices = @transform_2, window_bounds = array<i64: 128, 256>}, {pipeline_mode = #tpu.pipeline_mode<synchronous>, transform_indices = @transform_3, window_bounds = array<i64: 1, 256>}, {transform_indices = @transform_4, window_bounds = array<i64: 1, 128, 128>}, {pipeline_mode = #tpu.pipeline_mode<synchronous>, transform_indices = @transform_5, window_bounds = array<i64: 128, 256>}, {pipeline_mode = #tpu.pipeline_mode<synchronous>, transform_indices = @transform_6, window_bounds = array<i64: 1, 256>}, {transform_indices = @transform_7, window_bounds = array<i64: 1, 128, 256>}]} {
    %c0 = arith.constant 0 : index
    %c0_0 = arith.constant 0 : index
    %c0_1 = arith.constant 0 : index
    %0 = vector.load %arg2[%c0, %c0_0, %c0_1] : memref<1x128x128xf32, #tpu.memory_space<vmem>>, vector<1x128x128xf32>
    %1 = vector.shape_cast %0 : vector<1x128x128xf32> to vector<128x128xf32>
    %c0_2 = arith.constant 0 : index
    %c0_3 = arith.constant 0 : index
    %c0_4 = arith.constant 0 : index
    %2 = vector.load %arg3[%c0_2, %c0_3, %c0_4] : memref<1x128x128xf32, #tpu.memory_space<vmem>>, vector<1x128x128xf32>
    %3 = vector.shape_cast %2 : vector<1x128x128xf32> to vector<128x128xf32>
    %cst = arith.constant dense<0.000000e+00> : vector<128x128xf32>
    %4 = tpu.matmul %1, %3, %cst {dimension_numbers = #tpu.dot_dimension_numbers<[1], [0], [0], [1], [0, 0, 1, 1], [], []>} : vector<128x128xf32>, vector<128x128xf32>, vector<128x128xf32> -> vector<128x128xf32>
    %c0_5 = arith.constant 0 : index
    %c0_6 = arith.constant 0 : index
    %5 = vector.load %arg4[%c0_5, %c0_6] : memref<128x256xf32, #tpu.memory_space<vmem>>, vector<128x256xf32>
    %cst_7 = arith.constant dense<0.000000e+00> : vector<128x256xf32>
    %6 = tpu.matmul %4, %5, %cst_7 {dimension_numbers = #tpu.dot_dimension_numbers<[1], [0], [0], [1], [0, 0, 1, 1], [], []>} : vector<128x128xf32>, vector<128x256xf32>, vector<128x256xf32> -> vector<128x256xf32>
    %c0_8 = arith.constant 0 : index
    %c0_9 = arith.constant 0 : index
    %7 = vector.load %arg5[%c0_8, %c0_9] : memref<1x256xf32, #tpu.memory_space<vmem>>, vector<1x256xf32>
    %8 = vector.broadcast %7 : vector<1x256xf32> to vector<128x256xf32>
    %9 = arith.addf %6, %8 : vector<128x256xf32>
    %c0_10 = arith.constant 0 : index
    %c0_11 = arith.constant 0 : index
    %c0_12 = arith.constant 0 : index
    %10 = vector.load %arg6[%c0_10, %c0_11, %c0_12] : memref<1x128x128xf32, #tpu.memory_space<vmem>>, vector<1x128x128xf32>
    %11 = vector.shape_cast %10 : vector<1x128x128xf32> to vector<128x128xf32>
    %c0_13 = arith.constant 0 : index
    %c0_14 = arith.constant 0 : index
    %12 = vector.load %arg7[%c0_13, %c0_14] : memref<128x256xf32, #tpu.memory_space<vmem>>, vector<128x256xf32>
    %cst_15 = arith.constant dense<0.000000e+00> : vector<128x256xf32>
    %13 = tpu.matmul %11, %12, %cst_15 {dimension_numbers = #tpu.dot_dimension_numbers<[1], [0], [0], [1], [0, 0, 1, 1], [], []>} : vector<128x128xf32>, vector<128x256xf32>, vector<128x256xf32> -> vector<128x256xf32>
    %c0_16 = arith.constant 0 : index
    %c0_17 = arith.constant 0 : index
    %14 = vector.load %arg8[%c0_16, %c0_17] : memref<1x256xf32, #tpu.memory_space<vmem>>, vector<1x256xf32>
    %15 = vector.broadcast %14 : vector<1x256xf32> to vector<128x256xf32>
    %16 = arith.addf %13, %15 : vector<128x256xf32>
    %17 = arith.addf %9, %16 : vector<128x256xf32>
    %cst_18 = arith.constant 0.000000e+00 : f32
    %18 = vector.broadcast %cst_18 : f32 to vector<128x256xf32>
    %19 = arith.maximumf %17, %18 : vector<128x256xf32>
    %c0_19 = arith.constant 0 : index
    %c0_20 = arith.constant 0 : index
    %c0_21 = arith.constant 0 : index
    %20 = vector.load %arg9[%c0_19, %c0_20, %c0_21] : memref<1x128x256xf32, #tpu.memory_space<vmem>>, vector<1x128x256xf32>
    %21 = vector.shape_cast %20 : vector<1x128x256xf32> to vector<128x256xf32>
    %22 = vector.shape_cast %19 : vector<128x256xf32> to vector<1x128x256xf32>
    tpu.vector_store %arg9[%c0_19, %c0_20, %c0_21], %22 {strides = array<i32>} : memref<1x128x256xf32, #tpu.memory_space<vmem>>, vector<1x128x256xf32>,
    return
  }
  func.func @transform_0(%arg0: i32, %arg1: i32) -> (i32, i32, i32) {
    %c0_i32 = arith.constant 0 : i32
    %c0_i32_0 = arith.constant 0 : i32
    return %arg0, %arg1, %c0_i32 : i32, i32, i32
  }
  func.func @transform_1(%arg0: i32, %arg1: i32) -> (i32, i32, i32) {
    %c0_i32 = arith.constant 0 : i32
    %c0_i32_0 = arith.constant 0 : i32
    %c0_i32_1 = arith.constant 0 : i32
    return %arg0, %c0_i32, %c0_i32_0 : i32, i32, i32
  }
  func.func @transform_2(%arg0: i32, %arg1: i32) -> (i32, i32) {
    %c0_i32 = arith.constant 0 : i32
    %c0_i32_0 = arith.constant 0 : i32
    %c0_i32_1 = arith.constant 0 : i32
    return %c0_i32, %c0_i32_0 : i32, i32
  }
  func.func @transform_3(%arg0: i32, %arg1: i32) -> (i32, i32) {
    %c0_i32 = arith.constant 0 : i32
    %c0_i32_0 = arith.constant 0 : i32
    %c0_i32_1 = arith.constant 0 : i32
    return %c0_i32, %c0_i32_0 : i32, i32
  }
  func.func @transform_4(%arg0: i32, %arg1: i32) -> (i32, i32, i32) {
    %c0_i32 = arith.constant 0 : i32
    %c0_i32_0 = arith.constant 0 : i32
    return %arg0, %arg1, %c0_i32 : i32, i32, i32
  }
  func.func @transform_5(%arg0: i32, %arg1: i32) -> (i32, i32) {
    %c0_i32 = arith.constant 0 : i32
    %c0_i32_0 = arith.constant 0 : i32
    %c0_i32_1 = arith.constant 0 : i32
    return %c0_i32, %c0_i32_0 : i32, i32
  }
  func.func @transform_6(%arg0: i32, %arg1: i32) -> (i32, i32) {
    %c0_i32 = arith.constant 0 : i32
    %c0_i32_0 = arith.constant 0 : i32
    %c0_i32_1 = arith.constant 0 : i32
    return %c0_i32, %c0_i32_0 : i32, i32
  }
  func.func @transform_7(%arg0: i32, %arg1: i32) -> (i32, i32, i32) {
    %c0_i32 = arith.constant 0 : i32
    %c0_i32_0 = arith.constant 0 : i32
    return %arg0, %arg1, %c0_i32 : i32, i32, i32
  }
}

</mosaic_0001>

<llo_original>
// kernel: tpu_custom_call.1
$region0: #{tpu_custom_call.1}
  #allocation0 [shape = 'u32[]', space=smem, size = 0x4, offset = 0x4, fixed_abs, tag = 'smem constant byte address 0x4 - core index']
  #allocation1 [shape = 'u32[144,128]{1,0:T(1,128)}', space=vmem, size = 0x12000, scoped, tag = 'internal scratch']
  %s0 = inlined_call_operand.hbm [shape: f32[2,128,128], index: 0, kind: input, shape index: {}]
  %s1 = inlined_call_operand.hbm [shape: f32[2,128,128], index: 1, kind: input, shape index: {}]
  %s2 = inlined_call_operand.hbm [shape: f32[128,256], index: 2, kind: input, shape index: {}]
  %s3 = inlined_call_operand.vmem [shape: f32[1,256], index: 3, kind: input, shape index: {}]
  %s4 = inlined_call_operand.hbm [shape: f32[2,128,128], index: 4, kind: input, shape index: {}]
  %s5 = inlined_call_operand.hbm [shape: f32[128,256], index: 5, kind: input, shape index: {}]
  %s6 = inlined_call_operand.vmem [shape: f32[1,256], index: 6, kind: input, shape index: {}]
  %s7 = inlined_call_operand.hbm [shape: f32[2,128,256], index: 7, kind: output, shape index: {}]
  %s8 = sld [smem:[#allocation0]]
  $region81: #{tpu_custom_call.1} parent=0
    _
  %s10 = ssub.s32 1, %s8
  %s11 = scalar_select 0, %s10, %s8
  $region1: #{tpu_custom_call.1} parent=0
    #allocation2 [shape = 'u8[131072]{0}', space=vmem, size = 0x20000, scoped, tag = 'input window, operand 0']
    #allocation3 [shape = 's32[2]{0}', space=sflag, size = 0x8, scoped, tag = 'scoped memory for tpu_custom_call.1']
    #allocation4 [shape = 's32[2]{0}', space=sflag, size = 0x8, scoped, tag = 'scoped memory for tpu_custom_call.1']
    #allocation5 [shape = 'u8[131072]{0}', space=vmem, size = 0x20000, scoped, tag = 'input window, operand 1']
    #allocation6 [shape = 's32[2]{0}', space=sflag, size = 0x8, scoped, tag = 'scoped memory for tpu_custom_call.1']
    #allocation7 [shape = 'u8[131072]{0}', space=vmem, size = 0x20000, scoped, tag = 'input window, operand 2, single buffered']
    #allocation8 [shape = 'u8[131072]{0}', space=vmem, size = 0x20000, scoped, tag = 'input window, operand 4']
    #allocation9 [shape = 's32[2]{0}', space=sflag, size = 0x8, scoped, tag = 'scoped memory for tpu_custom_call.1']
    #allocation10 [shape = 'u8[131072]{0}', space=vmem, size = 0x20000, scoped, tag = 'input window, operand 5, single buffered']
    #allocation11 [shape = 'u8[262144]{0}', space=vmem, size = 0x40000, scoped, tag = 'output window, operand 0']
    %12 = vsyncpa [#allocation3], 0
    %s13 = scalar_lea.sflag [#allocation3], 1
    %14 = vsyncpa %s13, 0
    %15 = vsyncpa [#allocation6], 0
    %s16 = scalar_lea.sflag [#allocation6], 1
    %17 = vsyncpa %s16, 0
    %18 = vsyncpa [#allocation9], 0
    %s19 = scalar_lea.sflag [#allocation9], 1
    %20 = vsyncpa %s19, 0
    %21 = vsyncpa [#allocation4], 0
    %s22 = scalar_lea.sflag [#allocation4], 1
    %23 = vsyncpa %s22, 0
    loop: start=0, step=1, limit=4
    $region2: #{tpu_custom_call.1} parent=1 // loop_pre_header
      _
    $region3: #{tpu_custom_call.1} parent=1 // loop_header
      %s25 = sphi 0, %s29
      %p26 = scmp.ge.s32.totalorder %s25, 4
      %s32 = sphi 0, %s44
      %s33 = sphi 0, %s40
      %s34 = sphi 0, %s32
      %s35 = sphi 0, %s33
      %s36 = sphi 0, %s34
      %s37 = sphi 0, %s35
      %s49 = sphi 0, %s51
      %s52 = sphi 0, %s49
      %s53 = sphi 0, %s52
      %s69 = sphi 0, %s53
      %s75 = sphi 0, %s77
      %s78 = sphi 0, %s75
      %s79 = sphi 0, %s78
      %s95 = sphi 0, %s79
      %s99 = sphi 0, %s99
      %s101 = sphi 0, %s99
      %s102 = sphi 0, %s101
      %s116 = sphi 0, %s102
      %s120 = sphi 0, %s120
      %s122 = sphi 0, %s120
      %s123 = sphi 0, %s122
      %s137 = sphi 0, %s123
      %s145 = sphi 0, %s147
      %s148 = sphi 0, %s145
      %s149 = sphi 0, %s148
      %s165 = sphi 0, %s149
      %s169 = sphi 0, %s169
      %s171 = sphi 0, %s169
      %s172 = sphi 0, %s171
      %s186 = sphi 0, %s172
      %s190 = sphi 0, %s190
      %s192 = sphi 0, %s190
      %s193 = sphi 0, %s192
      %s207 = sphi 0, %s193
      %s215 = sphi 0, %s217
      %s218 = sphi 0, %s215
      %s219 = sphi 0, %s218
      %s235 = sphi 0, %s219
    $region4: #{tpu_custom_call.1} parent=1 // loop_header_branch
      %28 = sbr.rel (%p26) target = $region8
    $region5: #{tpu_custom_call.1} parent=1 // loop_body
      %s30 = ssub.s32 %s25, 1
      %s31 = ssub.s32 %s25, 2
      %s38 = sadd.s32 1, %s33
      %p39 = scmp.ge.s32.totalorder %s38, 1
      %s40 = scalar_select %p39, 0, %s38
      %s41 = sadd.s32 1, %s32
      %s42 = scalar_select %p39, %s41, %s32
      %p43 = scmp.ge.s32.totalorder %s42, 2
      %s44 = scalar_select %p43, 0, %s42
      %s45 = ssub.s32 %s32, %s44
      %s46 = ssub.s32 %s33, %s40
      %s47 = sor.u32 %s45, %s46
      %p48 = scmp.eq.s32.totalorder %s47, 0
      %s50 = sadd.s32 %s49, 1
      %s51 = scalar_select %p48, %s49, %s50
      %p54 = pneg %p48
      %p55 = scmp.eq.s32.totalorder %s25, 1
      %p56 = por %p54, %p55
      %p57 = scmp.ne.s32.totalorder %s49, %s52
      %p58 = scmp.eq.s32.totalorder %s25, 0
      %p59 = por %p57, %p58
      %p60 = scmp.ne.s32.totalorder %s49, %s52
      %p61 = scmp.eq.s32.totalorder %s30, 1
      %p62 = por %p60, %p61
      %p63 = scmp.ne.s32.totalorder %s52, %s53
      %p64 = scmp.eq.s32.totalorder %s30, 0
      %p65 = por %p63, %p64
      %p66 = scmp.ne.s32.totalorder %s52, %s53
      %p67 = scmp.eq.s32.totalorder %s31, 1
      %p68 = por %p66, %p67
      %p70 = scmp.ne.s32.totalorder %s53, %s69
      %p71 = scmp.eq.s32.totalorder %s31, 0
      %p72 = por %p70, %p71
      %s73 = ssub.s32 %s32, %s44
      %p74 = scmp.eq.s32.totalorder %s73, 0
      %s76 = sadd.s32 %s75, 1
      %s77 = scalar_select %p74, %s75, %s76
      %p80 = pneg %p74
      %p81 = scmp.eq.s32.totalorder %s25, 1
      %p82 = por %p80, %p81
      %p83 = scmp.ne.s32.totalorder %s75, %s78
      %p84 = scmp.eq.s32.totalorder %s25, 0
      %p85 = por %p83, %p84
      %p86 = scmp.ne.s32.totalorder %s75, %s78
      %p87 = scmp.eq.s32.totalorder %s30, 1
      %p88 = por %p86, %p87
      %p89 = scmp.ne.s32.totalorder %s78, %s79
      %p90 = scmp.eq.s32.totalorder %s30, 0
      %p91 = por %p89, %p90
      %p92 = scmp.ne.s32.totalorder %s78, %s79
      %p93 = scmp.eq.s32.totalorder %s31, 1
      %p94 = por %p92, %p93
      %p96 = scmp.ne.s32.totalorder %s79, %s95
      %p97 = scmp.eq.s32.totalorder %s31, 0
      %p98 = por %p96, %p97
      %s100 = sadd.s32 %s99, 1
      %p103 = scmp.eq.s32.totalorder %s25, 1
      %p104 = scmp.ne.s32.totalorder %s99, %s101
      %p105 = scmp.eq.s32.totalorder %s25, 0
      %p106 = por %p104, %p105
      %p107 = scmp.ne.s32.totalorder %s99, %s101
      %p108 = scmp.eq.s32.totalorder %s30, 1
      %p109 = por %p107, %p108
      %p110 = scmp.ne.s32.totalorder %s101, %s102
      %p111 = scmp.eq.s32.totalorder %s30, 0
      %p112 = por %p110, %p111
      %p113 = scmp.ne.s32.totalorder %s101, %s102
      %p114 = scmp.eq.s32.totalorder %s31, 1
      %p115 = por %p113, %p114
      %p117 = scmp.ne.s32.totalorder %s102, %s116
      %p118 = scmp.eq.s32.totalorder %s31, 0
      %p119 = por %p117, %p118
      %s121 = sadd.s32 %s120, 1
      %p124 = scmp.eq.s32.totalorder %s25, 1
      %p125 = scmp.ne.s32.totalorder %s120, %s122
      %p126 = scmp.eq.s32.totalorder %s25, 0
      %p127 = por %p125, %p126
      %p128 = scmp.ne.s32.totalorder %s120, %s122
      %p129 = scmp.eq.s32.totalorder %s30, 1
      %p130 = por %p128, %p129
      %p131 = scmp.ne.s32.totalorder %s122, %s123
      %p132 = scmp.eq.s32.totalorder %s30, 0
      %p133 = por %p131, %p132
      %p134 = scmp.ne.s32.totalorder %s122, %s123
      %p135 = scmp.eq.s32.totalorder %s31, 1
      %p136 = por %p134, %p135
      %p138 = scmp.ne.s32.totalorder %s123, %s137
      %p139 = scmp.eq.s32.totalorder %s31, 0
      %p140 = por %p138, %p139
      %s141 = ssub.s32 %s32, %s44
      %s142 = ssub.s32 %s33, %s40
      %s143 = sor.u32 %s141, %s142
      %p144 = scmp.eq.s32.totalorder %s143, 0
      %s146 = sadd.s32 %s145, 1
      %s147 = scalar_select %p144, %s145, %s146
      %p150 = pneg %p144
      %p151 = scmp.eq.s32.totalorder %s25, 1
      %p152 = por %p150, %p151
      %p153 = scmp.ne.s32.totalorder %s145, %s148
      %p154 = scmp.eq.s32.totalorder %s25, 0
      %p155 = por %p153, %p154
      %p156 = scmp.ne.s32.totalorder %s145, %s148
      %p157 = scmp.eq.s32.totalorder %s30, 1
      %p158 = por %p156, %p157
      %p159 = scmp.ne.s32.totalorder %s148, %s149
      %p160 = scmp.eq.s32.totalorder %s30, 0
      %p161 = por %p159, %p160
      %p162 = scmp.ne.s32.totalorder %s148, %s149
      %p163 = scmp.eq.s32.totalorder %s31, 1
      %p164 = por %p162, %p163
      %p166 = scmp.ne.s32.totalorder %s149, %s165
      %p167 = scmp.eq.s32.totalorder %s31, 0
      %p168 = por %p166, %p167
      %s170 = sadd.s32 %s169, 1
      %p173 = scmp.eq.s32.totalorder %s25, 1
      %p174 = scmp.ne.s32.totalorder %s169, %s171
      %p175 = scmp.eq.s32.totalorder %s25, 0
      %p176 = por %p174, %p175
      %p177 = scmp.ne.s32.totalorder %s169, %s171
      %p178 = scmp.eq.s32.totalorder %s30, 1
      %p179 = por %p177, %p178
      %p180 = scmp.ne.s32.totalorder %s171, %s172
      %p181 = scmp.eq.s32.totalorder %s30, 0
      %p182 = por %p180, %p181
      %p183 = scmp.ne.s32.totalorder %s171, %s172
      %p184 = scmp.eq.s32.totalorder %s31, 1
      %p185 = por %p183, %p184
      %p187 = scmp.ne.s32.totalorder %s172, %s186
      %p188 = scmp.eq.s32.totalorder %s31, 0
      %p189 = por %p187, %p188
      %s191 = sadd.s32 %s190, 1
      %p194 = scmp.eq.s32.totalorder %s25, 1
      %p195 = scmp.ne.s32.totalorder %s190, %s192
      %p196 = scmp.eq.s32.totalorder %s25, 0
      %p197 = por %p195, %p196
      %p198 = scmp.ne.s32.totalorder %s190, %s192
      %p199 = scmp.eq.s32.totalorder %s30, 1
      %p200 = por %p198, %p199
      %p201 = scmp.ne.s32.totalorder %s192, %s193
      %p202 = scmp.eq.s32.totalorder %s30, 0
      %p203 = por %p201, %p202
      %p204 = scmp.ne.s32.totalorder %s192, %s193
      %p205 = scmp.eq.s32.totalorder %s31, 1
      %p206 = por %p204, %p205
      %p208 = scmp.ne.s32.totalorder %s193, %s207
      %p209 = scmp.eq.s32.totalorder %s31, 0
      %p210 = por %p208, %p209
      %s211 = ssub.s32 %s32, %s44
      %s212 = ssub.s32 %s33, %s40
      %s213 = sor.u32 %s211, %s212
      %p214 = scmp.eq.s32.totalorder %s213, 0
      %s216 = sadd.s32 %s215, 1
      %s217 = scalar_select %p214, %s215, %s216
      %p220 = pneg %p214
      %p221 = scmp.eq.s32.totalorder %s25, 1
      %p222 = por %p220, %p221
      %p223 = scmp.ne.s32.totalorder %s215, %s218
      %p224 = scmp.eq.s32.totalorder %s25, 0
      %p225 = por %p223, %p224
      %p226 = scmp.ne.s32.totalorder %s215, %s218
      %p227 = scmp.eq.s32.totalorder %s30, 1
      %p228 = por %p226, %p227
      %p229 = scmp.ne.s32.totalorder %s218, %s219
      %p230 = scmp.eq.s32.totalorder %s30, 0
      %p231 = por %p229, %p230
      %p232 = scmp.ne.s32.totalorder %s218, %s219
      %p233 = scmp.eq.s32.totalorder %s31, 1
      %p234 = por %p232, %p233
      %p236 = scmp.ne.s32.totalorder %s219, %s235
      %p237 = scmp.eq.s32.totalorder %s31, 0
      %p238 = por %p236, %p237
      %p239 = scmp.le.s32.totalorder 1, %s25
      %p240 = scmp.lt.s32.totalorder %s25, 3
      %p241 = pnand %p239, %p240
      %p242 = pneg %p241
      // Predicated region
      $region9: #{tpu_custom_call.1} parent=5 // pred_check
        _
      $region10: #{tpu_custom_call.1} parent=5 // pred_check_branch
        %244 = sbr.rel (%p241) target = $region12
      $region11: #{tpu_custom_call.1} parent=5 // pred_region
        %s245 = ssub.s32 %s25, 1
        // Predicated region
        $region13: #{tpu_custom_call.1} parent=11 // pred_check
          %p246 = pneg %p112
        $region14: #{tpu_custom_call.1} parent=11 // pred_check_branch
          %248 = sbr.rel (%p246) target = $region16
        $region15: #{tpu_custom_call.1} parent=11 // pred_region
          %s250 = ssub.s32 4096, 4096
          %251 = vsyncadd [#allocation6], %s250
          %s252 = sshll.u32 [#allocation7], 4
          %s253 = int_to_ptr.vmem [resolvable:$true] %s252
          %258 = dma.hbm_to_vmem [thread:$0]  %s2, 4096, %s253, [#allocation6], 256, 256, 16
        $region16: #{tpu_custom_call.1} parent=11 // pred_fallthru
          _
        // Predicated region
        $region17: #{tpu_custom_call.1} parent=11 // pred_check
          %p259 = pneg %p133
        $region18: #{tpu_custom_call.1} parent=11 // pred_check_branch
          %261 = sbr.rel (%p259) target = $region20
        $region19: #{tpu_custom_call.1} parent=11 // pred_region
          _
        $region20: #{tpu_custom_call.1} parent=11 // pred_fallthru
          _
        // Predicated region
        $region21: #{tpu_custom_call.1} parent=11 // pred_check
          %p262 = pneg %p182
        $region22: #{tpu_custom_call.1} parent=11 // pred_check_branch
          %264 = sbr.rel (%p262) target = $region24
        $region23: #{tpu_custom_call.1} parent=11 // pred_region
          %s266 = ssub.s32 4096, 4096
          %267 = vsyncadd [#allocation9], %s266
          %s268 = sshll.u32 [#allocation10], 4
          %s269 = int_to_ptr.vmem [resolvable:$true] %s268
          %274 = dma.hbm_to_vmem [thread:$0]  %s5, 4096, %s269, [#allocation9], 256, 256, 16
        $region24: #{tpu_custom_call.1} parent=11 // pred_fallthru
          _
        // Predicated region
        $region25: #{tpu_custom_call.1} parent=11 // pred_check
          %p275 = pneg %p203
        $region26: #{tpu_custom_call.1} parent=11 // pred_check_branch
          %277 = sbr.rel (%p275) target = $region28
        $region27: #{tpu_custom_call.1} parent=11 // pred_region
          _
        $region28: #{tpu_custom_call.1} parent=11 // pred_fallthru
          _
      $region12: #{tpu_custom_call.1} parent=5 // pred_fallthru
        _
      %p278 = scmp.lt.s32.totalorder %s25, 2
      // Predicated region
      $region29: #{tpu_custom_call.1} parent=5 // pred_check
        %p279 = pneg %p278
      $region30: #{tpu_custom_call.1} parent=5 // pred_check_branch
        %281 = sbr.rel (%p279) target = $region32
      $region31: #{tpu_custom_call.1} parent=5 // pred_region
        // Predicated region
        $region33: #{tpu_custom_call.1} parent=31 // pred_check
          %p282 = pneg %p59
        $region34: #{tpu_custom_call.1} parent=31 // pred_check_branch
          %284 = sbr.rel (%p282) target = $region36
        $region35: #{tpu_custom_call.1} parent=31 // pred_region
          %s285 = sand.u32 %s49, 1
          %s286 = scalar_lea.sflag [#allocation3], %s285
          %s287 = sand.u32 %s49, 1
          %s288 = smul.addr %s287, 128
          %s289 = scalar_lea.vmem [#allocation2], %s288
          %s290 = smul.u32 16, %s33
          %s292 = ssub.s32 2048, 2048
          %293 = vsyncadd %s286, %s292
          %s294 = smul.addr %s32, 16
          %s295 = sadd.s32 %s290, %s294
          %s296 = smul.addr %s295, 128
          %s297 = scalar_lea.hbm %s0, %s296
          %s298 = sshll.u32 %s289, 4
          %s299 = int_to_ptr.vmem [resolvable:$true] %s298
          %304 = dma.hbm_to_vmem [thread:$0]  %s297, 2048, %s299, %s286, 128, 128, 8
        $region36: #{tpu_custom_call.1} parent=31 // pred_fallthru
          _
        // Predicated region
        $region37: #{tpu_custom_call.1} parent=31 // pred_check
          %p305 = pneg %p85
        $region38: #{tpu_custom_call.1} parent=31 // pred_check_branch
          %307 = sbr.rel (%p305) target = $region40
        $region39: #{tpu_custom_call.1} parent=31 // pred_region
          %s308 = sand.u32 %s25, 1
          %s309 = scalar_lea.sflag [#allocation6], %s308
          %s310 = sand.u32 %s75, 1
          %s311 = smul.addr %s310, 128
          %s312 = scalar_lea.vmem [#allocation5], %s311
          %s314 = ssub.s32 2048, 2048
          %315 = vsyncadd %s309, %s314
          %s316 = smul.addr %s32, 16
          %s317 = smul.addr %s316, 128
          %s318 = scalar_lea.hbm %s1, %s317
          %s319 = sshll.u32 %s312, 4
          %s320 = int_to_ptr.vmem [resolvable:$true] %s319
          %325 = dma.hbm_to_vmem [thread:$0]  %s318, 2048, %s320, %s309, 128, 128, 8
        $region40: #{tpu_custom_call.1} parent=31 // pred_fallthru
          _
        // Predicated region
        $region41: #{tpu_custom_call.1} parent=31 // pred_check
          %p326 = pneg %p155
        $region42: #{tpu_custom_call.1} parent=31 // pred_check_branch
          %328 = sbr.rel (%p326) target = $region44
        $region43: #{tpu_custom_call.1} parent=31 // pred_region
          %s329 = sand.u32 %s25, 1
          %s330 = scalar_lea.sflag [#allocation9], %s329
          %s331 = sand.u32 %s145, 1
          %s332 = smul.addr %s331, 128
          %s333 = scalar_lea.vmem [#allocation8], %s332
          %s334 = smul.u32 16, %s33
          %s336 = ssub.s32 2048, 2048
          %337 = vsyncadd %s330, %s336
          %s338 = smul.addr %s32, 16
          %s339 = sadd.s32 %s334, %s338
          %s340 = smul.addr %s339, 128
          %s341 = scalar_lea.hbm %s4, %s340
          %s342 = sshll.u32 %s333, 4
          %s343 = int_to_ptr.vmem [resolvable:$true] %s342
          %348 = dma.hbm_to_vmem [thread:$0]  %s341, 2048, %s343, %s330, 128, 128, 8
        $region44: #{tpu_custom_call.1} parent=31 // pred_fallthru
          _
      $region32: #{tpu_custom_call.1} parent=5 // pred_fallthru
        _
      %p349 = scmp.le.s32.totalorder 1, %s25
      %p350 = scmp.lt.s32.totalorder %s25, 3
      %p351 = pnand %p349, %p350
      %p352 = pneg %p351
      // Predicated region
      $region45: #{tpu_custom_call.1} parent=5 // pred_check
        _
      $region46: #{tpu_custom_call.1} parent=5 // pred_check_branch
        %354 = sbr.rel (%p351) target = $region48
      $region47: #{tpu_custom_call.1} parent=5 // pred_region
        %s355 = ssub.s32 %s25, 1
        %s356 = sand.u32 %s52, 1
        %s357 = scalar_lea.sflag [#allocation3], %s356
        %s358 = sand.u32 %s52, 1
        %s359 = smul.addr %s358, 128
        %s360 = scalar_lea.vmem [#allocation2], %s359
        // Predicated region
        $region49: #{tpu_custom_call.1} parent=47 // pred_check
          %p361 = pneg %p65
        $region50: #{tpu_custom_call.1} parent=47 // pred_check_branch
          %363 = sbr.rel (%p361) target = $region52
        $region51: #{tpu_custom_call.1} parent=47 // pred_region
          %364 = dma.done %s357, 2048
        $region52: #{tpu_custom_call.1} parent=47 // pred_fallthru
          _
        %s365 = sand.u32 %s30, 1
        %s366 = scalar_lea.sflag [#allocation6], %s365
        %s367 = sand.u32 %s78, 1
        %s368 = smul.addr %s367, 128
        %s369 = scalar_lea.vmem [#allocation5], %s368
        // Predicated region
        $region53: #{tpu_custom_call.1} parent=47 // pred_check
          %p370 = pneg %p91
        $region54: #{tpu_custom_call.1} parent=47 // pred_check_branch
          %372 = sbr.rel (%p370) target = $region56
        $region55: #{tpu_custom_call.1} parent=47 // pred_region
          %373 = dma.done %s366, 2048
        $region56: #{tpu_custom_call.1} parent=47 // pred_fallthru
          _
        // Predicated region
        $region57: #{tpu_custom_call.1} parent=47 // pred_check
          %p374 = pneg %p112
        $region58: #{tpu_custom_call.1} parent=47 // pred_check_branch
          %376 = sbr.rel (%p374) target = $region60
        $region59: #{tpu_custom_call.1} parent=47 // pred_region
          %377 = dma.done [#allocation6], 4096
        $region60: #{tpu_custom_call.1} parent=47 // pred_fallthru
          _
        %s378 = sand.u32 %s30, 1
        %s379 = scalar_lea.sflag [#allocation9], %s378
        %s380 = sand.u32 %s148, 1
        %s381 = smul.addr %s380, 128
        %s382 = scalar_lea.vmem [#allocation8], %s381
        // Predicated region
        $region61: #{tpu_custom_call.1} parent=47 // pred_check
          %p383 = pneg %p161
        $region62: #{tpu_custom_call.1} parent=47 // pred_check_branch
          %385 = sbr.rel (%p383) target = $region64
        $region63: #{tpu_custom_call.1} parent=47 // pred_region
          %386 = dma.done %s379, 2048
        $region64: #{tpu_custom_call.1} parent=47 // pred_fallthru
          _
        // Predicated region
        $region65: #{tpu_custom_call.1} parent=47 // pred_check
          %p387 = pneg %p182
        $region66: #{tpu_custom_call.1} parent=47 // pred_check_branch
          %389 = sbr.rel (%p387) target = $region68
        $region67: #{tpu_custom_call.1} parent=47 // pred_region
          %390 = dma.done [#allocation9], 4096
        $region68: #{tpu_custom_call.1} parent=47 // pred_fallthru
          _
        %s391 = sand.u32 %s52, 1
        %s392 = scalar_lea.sflag [#allocation3], %s391
        %s393 = sand.u32 %s52, 1
        %s394 = smul.addr %s393, 128
        %s395 = scalar_lea.vmem [#allocation2], %s394
        %p396 = pneg %p65
        %p397 = pneg %p62
        %s398 = sand.u32 %s30, 1
        %s399 = scalar_lea.sflag [#allocation6], %s398
        %s400 = sand.u32 %s78, 1
        %s401 = smul.addr %s400, 128
        %s402 = scalar_lea.vmem [#allocation5], %s401
        %p403 = pneg %p91
        %p404 = pneg %p88
        %p405 = pneg %p112
        %p406 = pneg %p109
        %p407 = pneg %p133
        %p408 = pneg %p130
        %s409 = sand.u32 %s30, 1
        %s410 = scalar_lea.sflag [#allocation9], %s409
        %s411 = sand.u32 %s148, 1
        %s412 = smul.addr %s411, 128
        %s413 = scalar_lea.vmem [#allocation8], %s412
        %p414 = pneg %p161
        %p415 = pneg %p158
        %p416 = pneg %p182
        %p417 = pneg %p179
        %p418 = pneg %p203
        %p419 = pneg %p200
        %p420 = pneg %p231
        %p421 = pneg %p228
        %s422 = sand.u32 %s218, 1
        %s423 = scalar_lea.sflag [#allocation4], %s422
        %s424 = sand.u32 %s218, 1
        %s425 = smul.addr %s424, 256
        %s426 = scalar_lea.vmem [#allocation11], %s425
        %s427 = smul.u32 16, %s35
        %s428 = smul.u32 16, %s35
        %s429 = smul.u32 16, %s35
        %v430 = vld [vmem:[%s360] sm:$0xff]
        %v431 = vld [vmem:[%s360 + $0x8] sm:$0xff]
        %v432 = vld [vmem:[%s360 + $0x10] sm:$0xff]
        %v433 = vld [vmem:[%s360 + $0x18] sm:$0xff]
        %v434 = vld [vmem:[%s360 + $0x20] sm:$0xff]
        %v435 = vld [vmem:[%s360 + $0x28] sm:$0xff]
        %v436 = vld [vmem:[%s360 + $0x30] sm:$0xff]
        %v437 = vld [vmem:[%s360 + $0x38] sm:$0xff]
        %v438 = vld [vmem:[%s360 + $0x40] sm:$0xff]
        %v439 = vld [vmem:[%s360 + $0x48] sm:$0xff]
        %v440 = vld [vmem:[%s360 + $0x50] sm:$0xff]
        %v441 = vld [vmem:[%s360 + $0x58] sm:$0xff]
        %v442 = vld [vmem:[%s360 + $0x60] sm:$0xff]
        %v443 = vld [vmem:[%s360 + $0x68] sm:$0xff]
        %v444 = vld [vmem:[%s360 + $0x70] sm:$0xff]
        %v445 = vld [vmem:[%s360 + $0x78] sm:$0xff]
        %v446 = vld [vmem:[%s369] sm:$0xff]
        %v447 = vld [vmem:[%s369 + $0x8] sm:$0xff]
        %v448 = vld [vmem:[%s369 + $0x10] sm:$0xff]
        %v449 = vld [vmem:[%s369 + $0x18] sm:$0xff]
        %v450 = vld [vmem:[%s369 + $0x20] sm:$0xff]
        %v451 = vld [vmem:[%s369 + $0x28] sm:$0xff]
        %v452 = vld [vmem:[%s369 + $0x30] sm:$0xff]
        %v453 = vld [vmem:[%s369 + $0x38] sm:$0xff]
        %v454 = vld [vmem:[%s369 + $0x40] sm:$0xff]
        %v455 = vld [vmem:[%s369 + $0x48] sm:$0xff]
        %v456 = vld [vmem:[%s369 + $0x50] sm:$0xff]
        %v457 = vld [vmem:[%s369 + $0x58] sm:$0xff]
        %v458 = vld [vmem:[%s369 + $0x60] sm:$0xff]
        %v459 = vld [vmem:[%s369 + $0x68] sm:$0xff]
        %v460 = vld [vmem:[%s369 + $0x70] sm:$0xff]
        %v461 = vld [vmem:[%s369 + $0x78] sm:$0xff]
        %462 = vmatprep.subr.mxu0 0.0
        %463 = vmatpush1.msra.mxu0 %v446
        %464 = vmatprep.subr.mxu0 0.0
        %465 = vmatpush1.msra.mxu0 %v447
        %466 = vmatprep.subr.mxu0 0.0
        %467 = vmatpush1.msra.mxu0 %v448
        %468 = vmatprep.subr.mxu0 0.0
        %469 = vmatpush1.msra.mxu0 %v449
        %470 = vmatprep.subr.mxu0 0.0
        %471 = vmatpush1.msra.mxu0 %v450
        %472 = vmatprep.subr.mxu0 0.0
        %473 = vmatpush1.msra.mxu0 %v451
        %474 = vmatprep.subr.mxu0 0.0
        %475 = vmatpush1.msra.mxu0 %v452
        %476 = vmatprep.subr.mxu0 0.0
        %477 = vmatpush1.msra.mxu0 %v453
        %478 = vmatprep.subr.mxu0 0.0
        %479 = vmatpush1.msra.mxu0 %v454
        %480 = vmatprep.subr.mxu0 0.0
        %481 = vmatpush1.msra.mxu0 %v455
        %482 = vmatprep.subr.mxu0 0.0
        %483 = vmatpush1.msra.mxu0 %v456
        %484 = vmatprep.subr.mxu0 0.0
        %485 = vmatpush1.msra.mxu0 %v457
        %486 = vmatprep.subr.mxu0 0.0
        %487 = vmatpush1.msra.mxu0 %v458
        %488 = vmatprep.subr.mxu0 0.0
        %489 = vmatpush1.msra.mxu0 %v459
        %490 = vmatprep.subr.mxu0 0.0
        %491 = vmatpush1.msra.mxu0 %v460
        %492 = vmatprep.subr.mxu0 0.0
        %493 = vmatpush1.msra.mxu0 %v461
        %494 = vmatprep.subr.mxu0 0.0
        %495 = vmatpush1.msra.mxu0 0.0
        %496 = vmatprep.subr.mxu0 0.0
        %497 = vmatpush1.msra.mxu0 0.0
        %498 = vmatprep.subr.mxu0 0.0
        %499 = vmatpush1.msra.mxu0 0.0
        %500 = vmatprep.subr.mxu0 0.0
        %501 = vmatpush1.msra.mxu0 0.0
        %502 = vmatprep.subr.mxu0 0.0
        %503 = vmatpush1.msra.mxu0 0.0
        %504 = vmatprep.subr.mxu0 0.0
        %505 = vmatpush1.msra.mxu0 0.0
        %506 = vmatprep.subr.mxu0 0.0
        %507 = vmatpush1.msra.mxu0 0.0
        %508 = vmatprep.subr.mxu0 0.0
        %509 = vmatpush1.msra.mxu0 0.0
        %510 = vmatprep.subr.mxu0 0.0
        %511 = vmatpush1.msra.mxu0 0.0
        %512 = vmatprep.subr.mxu0 0.0
        %513 = vmatpush1.msra.mxu0 0.0
        %514 = vmatprep.subr.mxu0 0.0
        %515 = vmatpush1.msra.mxu0 0.0
        %516 = vmatprep.subr.mxu0 0.0
        %517 = vmatpush1.msra.mxu0 0.0
        %518 = vmatprep.subr.mxu0 0.0
        %519 = vmatpush1.msra.mxu0 0.0
        %520 = vmatprep.subr.mxu0 0.0
        %521 = vmatpush1.msra.mxu0 0.0
        %522 = vmatprep.subr.mxu0 0.0
        %523 = vmatpush1.msra.mxu0 0.0
        %524 = vmatprep.subr.mxu0 0.0
        %525 = vmatpush1.msra.mxu0 0.0
        %526 = vmatprep.mubr.f32.mxu0 0.0
        %527 = vmatmul.mubr.f32.gmra.mrb[0].mxu0 %v430
        %v528 = vpop.f32.mrb[0].mxu0
        %v529 = vadd.f32 0.0, %v528
        %v530 = vpop.f32.mrb[0].mxu0
        %531 = vmatprep.mubr.f32.mxu0 0.0
        %532 = vmatmul.mubr.f32.gmra.mrb[0].mxu0 %v431
        %v533 = vpop.f32.mrb[0].mxu0
        %v534 = vadd.f32 0.0, %v533
        %v535 = vpop.f32.mrb[0].mxu0
        %536 = vmatprep.mubr.f32.mxu0 0.0
        %537 = vmatmul.mubr.f32.gmra.mrb[0].mxu0 %v432
        %v538 = vpop.f32.mrb[0].mxu0
        %v539 = vadd.f32 0.0, %v538
        %v540 = vpop.f32.mrb[0].mxu0
        %541 = vmatprep.mubr.f32.mxu0 0.0
        %542 = vmatmul.mubr.f32.gmra.mrb[0].mxu0 %v433
        %v543 = vpop.f32.mrb[0].mxu0
        %v544 = vadd.f32 0.0, %v543
        %v545 = vpop.f32.mrb[0].mxu0
        %546 = vmatprep.mubr.f32.mxu0 0.0
        %547 = vmatmul.mubr.f32.gmra.mrb[0].mxu0 %v434
        %v548 = vpop.f32.mrb[0].mxu0
        %v549 = vadd.f32 0.0, %v548
        %v550 = vpop.f32.mrb[0].mxu0
        %551 = vmatprep.mubr.f32.mxu0 0.0
        %552 = vmatmul.mubr.f32.gmra.mrb[0].mxu0 %v435
        %v553 = vpop.f32.mrb[0].mxu0
        %v554 = vadd.f32 0.0, %v553
        %v555 = vpop.f32.mrb[0].mxu0
        %556 = vmatprep.mubr.f32.mxu0 0.0
        %557 = vmatmul.mubr.f32.gmra.mrb[0].mxu0 %v436
        %v558 = vpop.f32.mrb[0].mxu0
        %v559 = vadd.f32 0.0, %v558
        %v560 = vpop.f32.mrb[0].mxu0
        %561 = vmatprep.mubr.f32.mxu0 0.0
        %562 = vmatmul.mubr.f32.gmra.mrb[0].mxu0 %v437
        %v563 = vpop.f32.mrb[0].mxu0
        %v564 = vadd.f32 0.0, %v563
        %v565 = vpop.f32.mrb[0].mxu0
        %566 = vmatprep.mubr.f32.mxu0 0.0
        %567 = vmatmul.mubr.f32.gmra.mrb[0].mxu0 %v438
        %v568 = vpop.f32.mrb[0].mxu0
        %v569 = vadd.f32 0.0, %v568
        %v570 = vpop.f32.mrb[0].mxu0
        %571 = vmatprep.mubr.f32.mxu0 0.0
        %572 = vmatmul.mubr.f32.gmra.mrb[0].mxu0 %v439
        %v573 = vpop.f32.mrb[0].mxu0
        %v574 = vadd.f32 0.0, %v573
        %v575 = vpop.f32.mrb[0].mxu0
        %576 = vmatprep.mubr.f32.mxu0 0.0
        %577 = vmatmul.mubr.f32.gmra.mrb[0].mxu0 %v440
        %v578 = vpop.f32.mrb[0].mxu0
        %v579 = vadd.f32 0.0, %v578
        %v580 = vpop.f32.mrb[0].mxu0
        %581 = vmatprep.mubr.f32.mxu0 0.0
        %582 = vmatmul.mubr.f32.gmra.mrb[0].mxu0 %v441
        %v583 = vpop.f32.mrb[0].mxu0
        %v584 = vadd.f32 0.0, %v583
        %v585 = vpop.f32.mrb[0].mxu0
        %586 = vmatprep.mubr.f32.mxu0 0.0
        %587 = vmatmul.mubr.f32.gmra.mrb[0].mxu0 %v442
        %v588 = vpop.f32.mrb[0].mxu0
        %v589 = vadd.f32 0.0, %v588
        %v590 = vpop.f32.mrb[0].mxu0
        %591 = vmatprep.mubr.f32.mxu0 0.0
        %592 = vmatmul.mubr.f32.gmra.mrb[0].mxu0 %v443
        %v593 = vpop.f32.mrb[0].mxu0
        %v594 = vadd.f32 0.0, %v593
        %v595 = vpop.f32.mrb[0].mxu0
        %596 = vmatprep.mubr.f32.mxu0 0.0
        %597 = vmatmul.mubr.f32.gmra.mrb[0].mxu0 %v444
        %v598 = vpop.f32.mrb[0].mxu0
        %v599 = vadd.f32 0.0, %v598
        %v600 = vpop.f32.mrb[0].mxu0
        %601 = vmatprep.mubr.f32.mxu0 0.0
        %602 = vmatmul.mubr.f32.gmra.mrb[0].mxu0 %v445
        %v603 = vpop.f32.mrb[0].mxu0
        %v604 = vadd.f32 0.0, %v603
        %v605 = vpop.f32.mrb[0].mxu0
        %606 = vdwg.mxu0
        %v607 = vld [vmem:[#allocation7] sm:$0xff]
        %v608 = vld [vmem:[#allocation7 + $0x8] sm:$0xff]
        %v609 = vld [vmem:[#allocation7 + $0x10] sm:$0xff]
        %v610 = vld [vmem:[#allocation7 + $0x18] sm:$0xff]
        %v611 = vld [vmem:[#allocation7 + $0x20] sm:$0xff]
        %v612 = vld [vmem:[#allocation7 + $0x28] sm:$0xff]
        %v613 = vld [vmem:[#allocation7 + $0x30] sm:$0xff]
        %v614 = vld [vmem:[#allocation7 + $0x38] sm:$0xff]
        %v615 = vld [vmem:[#allocation7 + $0x40] sm:$0xff]
        %v616 = vld [vmem:[#allocation7 + $0x48] sm:$0xff]
        %v617 = vld [vmem:[#allocation7 + $0x50] sm:$0xff]
        %v618 = vld [vmem:[#allocation7 + $0x58] sm:$0xff]
        %v619 = vld [vmem:[#allocation7 + $0x60] sm:$0xff]
        %v620 = vld [vmem:[#allocation7 + $0x68] sm:$0xff]
        %v621 = vld [vmem:[#allocation7 + $0x70] sm:$0xff]
        %v622 = vld [vmem:[#allocation7 + $0x78] sm:$0xff]
        %v623 = vld [vmem:[#allocation7 + $0x80] sm:$0xff]
        %v624 = vld [vmem:[#allocation7 + $0x88] sm:$0xff]
        %v625 = vld [vmem:[#allocation7 + $0x90] sm:$0xff]
        %v626 = vld [vmem:[#allocation7 + $0x98] sm:$0xff]
        %v627 = vld [vmem:[#allocation7 + $0xa0] sm:$0xff]
        %v628 = vld [vmem:[#allocation7 + $0xa8] sm:$0xff]
        %v629 = vld [vmem:[#allocation7 + $0xb0] sm:$0xff]
        %v630 = vld [vmem:[#allocation7 + $0xb8] sm:$0xff]
        %v631 = vld [vmem:[#allocation7 + $0xc0] sm:$0xff]
        %v632 = vld [vmem:[#allocation7 + $0xc8] sm:$0xff]
        %v633 = vld [vmem:[#allocation7 + $0xd0] sm:$0xff]
        %v634 = vld [vmem:[#allocation7 + $0xd8] sm:$0xff]
        %v635 = vld [vmem:[#allocation7 + $0xe0] sm:$0xff]
        %v636 = vld [vmem:[#allocation7 + $0xe8] sm:$0xff]
        %v637 = vld [vmem:[#allocation7 + $0xf0] sm:$0xff]
        %v638 = vld [vmem:[#allocation7 + $0xf8] sm:$0xff]
        %v639 = vld [vmem:[%s3] sm:$0x3]
        %v641 = vlaneseq
        %v642 = vshrl.u32 %v641, 7
        %v643 = vsub.s32 0, %v642
        %v644 = vrot.slane %v639, %v643
        %v645 = vlaneseq
        %v646 = vshrl.u32 %v645, 7
        %v647 = vsub.s32 1, %v646
        %v648 = vrot.slane %v639, %v647
        %651 = vmatprep.subr.mxu0 %v608
        %652 = vmatpush1.msra.mxu0 %v607
        %653 = vmatprep.subr.mxu0 %v610
        %654 = vmatpush1.msra.mxu0 %v609
        %655 = vmatprep.subr.mxu0 %v612
        %656 = vmatpush1.msra.mxu0 %v611
        %657 = vmatprep.subr.mxu0 %v614
        %658 = vmatpush1.msra.mxu0 %v613
        %659 = vmatprep.subr.mxu0 %v616
        %660 = vmatpush1.msra.mxu0 %v615
        %661 = vmatprep.subr.mxu0 %v618
        %662 = vmatpush1.msra.mxu0 %v617
        %663 = vmatprep.subr.mxu0 %v620
        %664 = vmatpush1.msra.mxu0 %v619
        %665 = vmatprep.subr.mxu0 %v622
        %666 = vmatpush1.msra.mxu0 %v621
        %667 = vmatprep.subr.mxu0 %v624
        %668 = vmatpush1.msra.mxu0 %v623
        %669 = vmatprep.subr.mxu0 %v626
        %670 = vmatpush1.msra.mxu0 %v625
        %671 = vmatprep.subr.mxu0 %v628
        %672 = vmatpush1.msra.mxu0 %v627
        %673 = vmatprep.subr.mxu0 %v630
        %674 = vmatpush1.msra.mxu0 %v629
        %675 = vmatprep.subr.mxu0 %v632
        %676 = vmatpush1.msra.mxu0 %v631
        %677 = vmatprep.subr.mxu0 %v634
        %678 = vmatpush1.msra.mxu0 %v633
        %679 = vmatprep.subr.mxu0 %v636
        %680 = vmatpush1.msra.mxu0 %v635
        %681 = vmatprep.subr.mxu0 %v638
        %682 = vmatpush1.msra.mxu0 %v637
        %683 = vmatprep.subr.mxu0 0.0
        %684 = vmatpush1.msra.mxu0 0.0
        %685 = vmatprep.subr.mxu0 0.0
        %686 = vmatpush1.msra.mxu0 0.0
        %687 = vmatprep.subr.mxu0 0.0
        %688 = vmatpush1.msra.mxu0 0.0
        %689 = vmatprep.subr.mxu0 0.0
        %690 = vmatpush1.msra.mxu0 0.0
        %691 = vmatprep.subr.mxu0 0.0
        %692 = vmatpush1.msra.mxu0 0.0
        %693 = vmatprep.subr.mxu0 0.0
        %694 = vmatpush1.msra.mxu0 0.0
        %695 = vmatprep.subr.mxu0 0.0
        %696 = vmatpush1.msra.mxu0 0.0
        %697 = vmatprep.subr.mxu0 0.0
        %698 = vmatpush1.msra.mxu0 0.0
        %699 = vmatprep.subr.mxu0 0.0
        %700 = vmatpush1.msra.mxu0 0.0
        %701 = vmatprep.subr.mxu0 0.0
        %702 = vmatpush1.msra.mxu0 0.0
        %703 = vmatprep.subr.mxu0 0.0
        %704 = vmatpush1.msra.mxu0 0.0
        %705 = vmatprep.subr.mxu0 0.0
        %706 = vmatpush1.msra.mxu0 0.0
        %707 = vmatprep.subr.mxu0 0.0
        %708 = vmatpush1.msra.mxu0 0.0
        %709 = vmatprep.subr.mxu0 0.0
        %710 = vmatpush1.msra.mxu0 0.0
        %711 = vmatprep.subr.mxu0 0.0
        %712 = vmatpush1.msra.mxu0 0.0
        %713 = vmatprep.subr.mxu0 0.0
        %714 = vmatpush1.msra.mxu0 0.0
        %715 = vmatprep.mubr.f32.mxu0 0.0
        %716 = vmatmul.mubr.f32.gmra.mrb[0].mxu0 %v529
        %v717 = vpop.f32.mrb[0].mxu0
        %v718 = vadd.f32 %v644, %v717
        %v719 = vpop.f32.mrb[0].mxu0
        %v720 = vadd.f32 %v648, %v719
        %721 = vmatprep.mubr.f32.mxu0 0.0
        %722 = vmatmul.mubr.f32.gmra.mrb[0].mxu0 %v534
        %v723 = vpop.f32.mrb[0].mxu0
        %v724 = vadd.f32 %v644, %v723
        %v725 = vpop.f32.mrb[0].mxu0
        %v726 = vadd.f32 %v648, %v725
        %727 = vmatprep.mubr.f32.mxu0 0.0
        %728 = vmatmul.mubr.f32.gmra.mrb[0].mxu0 %v539
        %v729 = vpop.f32.mrb[0].mxu0
        %v730 = vadd.f32 %v644, %v729
        %v731 = vpop.f32.mrb[0].mxu0
        %v732 = vadd.f32 %v648, %v731
        %733 = vmatprep.mubr.f32.mxu0 0.0
        %734 = vmatmul.mubr.f32.gmra.mrb[0].mxu0 %v544
        %v735 = vpop.f32.mrb[0].mxu0
        %v736 = vadd.f32 %v644, %v735
        %v737 = vpop.f32.mrb[0].mxu0
        %v738 = vadd.f32 %v648, %v737
        %739 = vmatprep.mubr.f32.mxu0 0.0
        %740 = vmatmul.mubr.f32.gmra.mrb[0].mxu0 %v549
        %v741 = vpop.f32.mrb[0].mxu0
        %v742 = vadd.f32 %v644, %v741
        %v743 = vpop.f32.mrb[0].mxu0
        %v744 = vadd.f32 %v648, %v743
        %745 = vmatprep.mubr.f32.mxu0 0.0
        %746 = vmatmul.mubr.f32.gmra.mrb[0].mxu0 %v554
        %v747 = vpop.f32.mrb[0].mxu0
        %v748 = vadd.f32 %v644, %v747
        %v749 = vpop.f32.mrb[0].mxu0
        %v750 = vadd.f32 %v648, %v749
        %751 = vmatprep.mubr.f32.mxu0 0.0
        %752 = vmatmul.mubr.f32.gmra.mrb[0].mxu0 %v559
        %v753 = vpop.f32.mrb[0].mxu0
        %v754 = vadd.f32 %v644, %v753
        %v755 = vpop.f32.mrb[0].mxu0
        %v756 = vadd.f32 %v648, %v755
        %757 = vmatprep.mubr.f32.mxu0 0.0
        %758 = vmatmul.mubr.f32.gmra.mrb[0].mxu0 %v564
        %v759 = vpop.f32.mrb[0].mxu0
        %v760 = vadd.f32 %v644, %v759
        %v761 = vpop.f32.mrb[0].mxu0
        %v762 = vadd.f32 %v648, %v761
        %763 = vmatprep.mubr.f32.mxu0 0.0
        %764 = vmatmul.mubr.f32.gmra.mrb[0].mxu0 %v569
        %v765 = vpop.f32.mrb[0].mxu0
        %v766 = vadd.f32 %v644, %v765
        %v767 = vpop.f32.mrb[0].mxu0
        %v768 = vadd.f32 %v648, %v767
        %769 = vmatprep.mubr.f32.mxu0 0.0
        %770 = vmatmul.mubr.f32.gmra.mrb[0].mxu0 %v574
        %v771 = vpop.f32.mrb[0].mxu0
        %v772 = vadd.f32 %v644, %v771
        %v773 = vpop.f32.mrb[0].mxu0
        %v774 = vadd.f32 %v648, %v773
        %775 = vmatprep.mubr.f32.mxu0 0.0
        %776 = vmatmul.mubr.f32.gmra.mrb[0].mxu0 %v579
        %v777 = vpop.f32.mrb[0].mxu0
        %v778 = vadd.f32 %v644, %v777
        %v779 = vpop.f32.mrb[0].mxu0
        %v780 = vadd.f32 %v648, %v779
        %781 = vmatprep.mubr.f32.mxu0 0.0
        %782 = vmatmul.mubr.f32.gmra.mrb[0].mxu0 %v584
        %v783 = vpop.f32.mrb[0].mxu0
        %v784 = vadd.f32 %v644, %v783
        %v785 = vpop.f32.mrb[0].mxu0
        %v786 = vadd.f32 %v648, %v785
        %787 = vmatprep.mubr.f32.mxu0 0.0
        %788 = vmatmul.mubr.f32.gmra.mrb[0].mxu0 %v589
        %v789 = vpop.f32.mrb[0].mxu0
        %v790 = vadd.f32 %v644, %v789
        %v791 = vpop.f32.mrb[0].mxu0
        %v792 = vadd.f32 %v648, %v791
        %793 = vmatprep.mubr.f32.mxu0 0.0
        %794 = vmatmul.mubr.f32.gmra.mrb[0].mxu0 %v594
        %v795 = vpop.f32.mrb[0].mxu0
        %v796 = vadd.f32 %v644, %v795
        %v797 = vpop.f32.mrb[0].mxu0
        %v798 = vadd.f32 %v648, %v797
        %799 = vmatprep.mubr.f32.mxu0 0.0
        %800 = vmatmul.mubr.f32.gmra.mrb[0].mxu0 %v599
        %v801 = vpop.f32.mrb[0].mxu0
        %v802 = vadd.f32 %v644, %v801
        %v803 = vpop.f32.mrb[0].mxu0
        %v804 = vadd.f32 %v648, %v803
        %805 = vmatprep.mubr.f32.mxu0 0.0
        %806 = vmatmul.mubr.f32.gmra.mrb[0].mxu0 %v604
        %v807 = vpop.f32.mrb[0].mxu0
        %v808 = vadd.f32 %v644, %v807
        %v809 = vpop.f32.mrb[0].mxu0
        %v810 = vadd.f32 %v648, %v809
        %811 = vdwg.mxu0
        %v812 = vld [vmem:[%s382] sm:$0xff]
        %v813 = vld [vmem:[%s382 + $0x8] sm:$0xff]
        %v814 = vld [vmem:[%s382 + $0x10] sm:$0xff]
        %v815 = vld [vmem:[%s382 + $0x18] sm:$0xff]
        %v816 = vld [vmem:[%s382 + $0x20] sm:$0xff]
        %v817 = vld [vmem:[%s382 + $0x28] sm:$0xff]
        %v818 = vld [vmem:[%s382 + $0x30] sm:$0xff]
        %v819 = vld [vmem:[%s382 + $0x38] sm:$0xff]
        %v820 = vld [vmem:[%s382 + $0x40] sm:$0xff]
        %v821 = vld [vmem:[%s382 + $0x48] sm:$0xff]
        %v822 = vld [vmem:[%s382 + $0x50] sm:$0xff]
        %v823 = vld [vmem:[%s382 + $0x58] sm:$0xff]
        %v824 = vld [vmem:[%s382 + $0x60] sm:$0xff]
        %v825 = vld [vmem:[%s382 + $0x68] sm:$0xff]
        %v826 = vld [vmem:[%s382 + $0x70] sm:$0xff]
        %v827 = vld [vmem:[%s382 + $0x78] sm:$0xff]
        %v828 = vld [vmem:[#allocation10] sm:$0xff]
        %v829 = vld [vmem:[#allocation10 + $0x8] sm:$0xff]
        %v830 = vld [vmem:[#allocation10 + $0x10] sm:$0xff]
        %v831 = vld [vmem:[#allocation10 + $0x18] sm:$0xff]
        %v832 = vld [vmem:[#allocation10 + $0x20] sm:$0xff]
        %v833 = vld [vmem:[#allocation10 + $0x28] sm:$0xff]
        %v834 = vld [vmem:[#allocation10 + $0x30] sm:$0xff]
        %v835 = vld [vmem:[#allocation10 + $0x38] sm:$0xff]
        %v836 = vld [vmem:[#allocation10 + $0x40] sm:$0xff]
        %v837 = vld [vmem:[#allocation10 + $0x48] sm:$0xff]
        %v838 = vld [vmem:[#allocation10 + $0x50] sm:$0xff]
        %v839 = vld [vmem:[#allocation10 + $0x58] sm:$0xff]
        %v840 = vld [vmem:[#allocation10 + $0x60] sm:$0xff]
        %v841 = vld [vmem:[#allocation10 + $0x68] sm:$0xff]
        %v842 = vld [vmem:[#allocation10 + $0x70] sm:$0xff]
        %v843 = vld [vmem:[#allocation10 + $0x78] sm:$0xff]
        %v844 = vld [vmem:[#allocation10 + $0x80] sm:$0xff]
        %v845 = vld [vmem:[#allocation10 + $0x88] sm:$0xff]
        %v846 = vld [vmem:[#allocation10 + $0x90] sm:$0xff]
        %v847 = vld [vmem:[#allocation10 + $0x98] sm:$0xff]
        %v848 = vld [vmem:[#allocation10 + $0xa0] sm:$0xff]
        %v849 = vld [vmem:[#allocation10 + $0xa8] sm:$0xff]
        %v850 = vld [vmem:[#allocation10 + $0xb0] sm:$0xff]
        %v851 = vld [vmem:[#allocation10 + $0xb8] sm:$0xff]
        %v852 = vld [vmem:[#allocation10 + $0xc0] sm:$0xff]
        %v853 = vld [vmem:[#allocation10 + $0xc8] sm:$0xff]
        %v854 = vld [vmem:[#allocation10 + $0xd0] sm:$0xff]
        %v855 = vld [vmem:[#allocation10 + $0xd8] sm:$0xff]
        %v856 = vld [vmem:[#allocation10 + $0xe0] sm:$0xff]
        %v857 = vld [vmem:[#allocation10 + $0xe8] sm:$0xff]
        %v858 = vld [vmem:[#allocation10 + $0xf0] sm:$0xff]
        %v859 = vld [vmem:[#allocation10 + $0xf8] sm:$0xff]
        %v860 = vld [vmem:[%s6] sm:$0x3]
        %v862 = vlaneseq
        %v863 = vshrl.u32 %v862, 7
        %v864 = vsub.s32 0, %v863
        %v865 = vrot.slane %v860, %v864
        %v866 = vlaneseq
        %v867 = vshrl.u32 %v866, 7
        %v868 = vsub.s32 1, %v867
        %v869 = vrot.slane %v860, %v868
        %872 = vmatprep.subr.mxu0 %v829
        %873 = vmatpush1.msra.mxu0 %v828
        %874 = vmatprep.subr.mxu0 %v831
        %875 = vmatpush1.msra.mxu0 %v830
        %876 = vmatprep.subr.mxu0 %v833
        %877 = vmatpush1.msra.mxu0 %v832
        %878 = vmatprep.subr.mxu0 %v835
        %879 = vmatpush1.msra.mxu0 %v834
        %880 = vmatprep.subr.mxu0 %v837
        %881 = vmatpush1.msra.mxu0 %v836
        %882 = vmatprep.subr.mxu0 %v839
        %883 = vmatpush1.msra.mxu0 %v838
        %884 = vmatprep.subr.mxu0 %v841
        %885 = vmatpush1.msra.mxu0 %v840
        %886 = vmatprep.subr.mxu0 %v843
        %887 = vmatpush1.msra.mxu0 %v842
        %888 = vmatprep.subr.mxu0 %v845
        %889 = vmatpush1.msra.mxu0 %v844
        %890 = vmatprep.subr.mxu0 %v847
        %891 = vmatpush1.msra.mxu0 %v846
        %892 = vmatprep.subr.mxu0 %v849
        %893 = vmatpush1.msra.mxu0 %v848
        %894 = vmatprep.subr.mxu0 %v851
        %895 = vmatpush1.msra.mxu0 %v850
        %896 = vmatprep.subr.mxu0 %v853
        %897 = vmatpush1.msra.mxu0 %v852
        %898 = vmatprep.subr.mxu0 %v855
        %899 = vmatpush1.msra.mxu0 %v854
        %900 = vmatprep.subr.mxu0 %v857
        %901 = vmatpush1.msra.mxu0 %v856
        %902 = vmatprep.subr.mxu0 %v859
        %903 = vmatpush1.msra.mxu0 %v858
        %904 = vmatprep.subr.mxu0 0.0
        %905 = vmatpush1.msra.mxu0 0.0
        %906 = vmatprep.subr.mxu0 0.0
        %907 = vmatpush1.msra.mxu0 0.0
        %908 = vmatprep.subr.mxu0 0.0
        %909 = vmatpush1.msra.mxu0 0.0
        %910 = vmatprep.subr.mxu0 0.0
        %911 = vmatpush1.msra.mxu0 0.0
        %912 = vmatprep.subr.mxu0 0.0
        %913 = vmatpush1.msra.mxu0 0.0
        %914 = vmatprep.subr.mxu0 0.0
        %915 = vmatpush1.msra.mxu0 0.0
        %916 = vmatprep.subr.mxu0 0.0
        %917 = vmatpush1.msra.mxu0 0.0
        %918 = vmatprep.subr.mxu0 0.0
        %919 = vmatpush1.msra.mxu0 0.0
        %920 = vmatprep.subr.mxu0 0.0
        %921 = vmatpush1.msra.mxu0 0.0
        %922 = vmatprep.subr.mxu0 0.0
        %923 = vmatpush1.msra.mxu0 0.0
        %924 = vmatprep.subr.mxu0 0.0
        %925 = vmatpush1.msra.mxu0 0.0
        %926 = vmatprep.subr.mxu0 0.0
        %927 = vmatpush1.msra.mxu0 0.0
        %928 = vmatprep.subr.mxu0 0.0
        %929 = vmatpush1.msra.mxu0 0.0
        %930 = vmatprep.subr.mxu0 0.0
        %931 = vmatpush1.msra.mxu0 0.0
        %932 = vmatprep.subr.mxu0 0.0
        %933 = vmatpush1.msra.mxu0 0.0
        %934 = vmatprep.subr.mxu0 0.0
        %935 = vmatpush1.msra.mxu0 0.0
        %936 = vmatprep.mubr.f32.mxu0 0.0
        %937 = vmatmul.mubr.f32.gmra.mrb[0].mxu0 %v812
        %v938 = vpop.f32.mrb[0].mxu0
        %v939 = vadd.f32 %v865, %v938
        %v940 = vpop.f32.mrb[0].mxu0
        %v941 = vadd.f32 %v869, %v940
        %942 = vmatprep.mubr.f32.mxu0 0.0
        %943 = vmatmul.mubr.f32.gmra.mrb[0].mxu0 %v813
        %v944 = vpop.f32.mrb[0].mxu0
        %v945 = vadd.f32 %v865, %v944
        %v946 = vpop.f32.mrb[0].mxu0
        %v947 = vadd.f32 %v869, %v946
        %948 = vmatprep.mubr.f32.mxu0 0.0
        %949 = vmatmul.mubr.f32.gmra.mrb[0].mxu0 %v814
        %v950 = vpop.f32.mrb[0].mxu0
        %v951 = vadd.f32 %v865, %v950
        %v952 = vpop.f32.mrb[0].mxu0
        %v953 = vadd.f32 %v869, %v952
        %954 = vmatprep.mubr.f32.mxu0 0.0
        %955 = vmatmul.mubr.f32.gmra.mrb[0].mxu0 %v815
        %v956 = vpop.f32.mrb[0].mxu0
        %v957 = vadd.f32 %v865, %v956
        %v958 = vpop.f32.mrb[0].mxu0
        %v959 = vadd.f32 %v869, %v958
        %960 = vmatprep.mubr.f32.mxu0 0.0
        %961 = vmatmul.mubr.f32.gmra.mrb[0].mxu0 %v816
        %v962 = vpop.f32.mrb[0].mxu0
        %v963 = vadd.f32 %v865, %v962
        %v964 = vpop.f32.mrb[0].mxu0
        %v965 = vadd.f32 %v869, %v964
        %966 = vmatprep.mubr.f32.mxu0 0.0
        %967 = vmatmul.mubr.f32.gmra.mrb[0].mxu0 %v817
        %v968 = vpop.f32.mrb[0].mxu0
        %v969 = vadd.f32 %v865, %v968
        %v970 = vpop.f32.mrb[0].mxu0
        %v971 = vadd.f32 %v869, %v970
        %972 = vmatprep.mubr.f32.mxu0 0.0
        %973 = vmatmul.mubr.f32.gmra.mrb[0].mxu0 %v818
        %v974 = vpop.f32.mrb[0].mxu0
        %v975 = vadd.f32 %v865, %v974
        %v976 = vpop.f32.mrb[0].mxu0
        %v977 = vadd.f32 %v869, %v976
        %978 = vmatprep.mubr.f32.mxu0 0.0
        %979 = vmatmul.mubr.f32.gmra.mrb[0].mxu0 %v819
        %v980 = vpop.f32.mrb[0].mxu0
        %v981 = vadd.f32 %v865, %v980
        %v982 = vpop.f32.mrb[0].mxu0
        %v983 = vadd.f32 %v869, %v982
        %984 = vmatprep.mubr.f32.mxu0 0.0
        %985 = vmatmul.mubr.f32.gmra.mrb[0].mxu0 %v820
        %v986 = vpop.f32.mrb[0].mxu0
        %v987 = vadd.f32 %v865, %v986
        %v988 = vpop.f32.mrb[0].mxu0
        %v989 = vadd.f32 %v869, %v988
        %990 = vmatprep.mubr.f32.mxu0 0.0
        %991 = vmatmul.mubr.f32.gmra.mrb[0].mxu0 %v821
        %v992 = vpop.f32.mrb[0].mxu0
        %v993 = vadd.f32 %v865, %v992
        %v994 = vpop.f32.mrb[0].mxu0
        %v995 = vadd.f32 %v869, %v994
        %996 = vmatprep.mubr.f32.mxu0 0.0
        %997 = vmatmul.mubr.f32.gmra.mrb[0].mxu0 %v822
        %v998 = vpop.f32.mrb[0].mxu0
        %v999 = vadd.f32 %v865, %v998
        %v1000 = vpop.f32.mrb[0].mxu0
        %v1001 = vadd.f32 %v869, %v1000
        %1002 = vmatprep.mubr.f32.mxu0 0.0
        %1003 = vmatmul.mubr.f32.gmra.mrb[0].mxu0 %v823
        %v1004 = vpop.f32.mrb[0].mxu0
        %v1005 = vadd.f32 %v865, %v1004
        %v1006 = vpop.f32.mrb[0].mxu0
        %v1007 = vadd.f32 %v869, %v1006
        %1008 = vmatprep.mubr.f32.mxu0 0.0
        %1009 = vmatmul.mubr.f32.gmra.mrb[0].mxu0 %v824
        %v1010 = vpop.f32.mrb[0].mxu0
        %v1011 = vadd.f32 %v865, %v1010
        %v1012 = vpop.f32.mrb[0].mxu0
        %v1013 = vadd.f32 %v869, %v1012
        %1014 = vmatprep.mubr.f32.mxu0 0.0
        %1015 = vmatmul.mubr.f32.gmra.mrb[0].mxu0 %v825
        %v1016 = vpop.f32.mrb[0].mxu0
        %v1017 = vadd.f32 %v865, %v1016
        %v1018 = vpop.f32.mrb[0].mxu0
        %v1019 = vadd.f32 %v869, %v1018
        %1020 = vmatprep.mubr.f32.mxu0 0.0
        %1021 = vmatmul.mubr.f32.gmra.mrb[0].mxu0 %v826
        %v1022 = vpop.f32.mrb[0].mxu0
        %v1023 = vadd.f32 %v865, %v1022
        %v1024 = vpop.f32.mrb[0].mxu0
        %v1025 = vadd.f32 %v869, %v1024
        %1026 = vmatprep.mubr.f32.mxu0 0.0
        %1027 = vmatmul.mubr.f32.gmra.mrb[0].mxu0 %v827
        %v1028 = vpop.f32.mrb[0].mxu0
        %v1029 = vadd.f32 %v865, %v1028
        %v1030 = vpop.f32.mrb[0].mxu0
        %v1031 = vadd.f32 %v869, %v1030
        %1032 = vdwg.mxu0
        %v1033 = vadd.f32 %v718, %v939
        %v1034 = vadd.f32 %v720, %v941
        %v1035 = vadd.f32 %v724, %v945
        %v1036 = vadd.f32 %v726, %v947
        %v1037 = vadd.f32 %v730, %v951
        %v1038 = vadd.f32 %v732, %v953
        %v1039 = vadd.f32 %v736, %v957
        %v1040 = vadd.f32 %v738, %v959
        %v1041 = vadd.f32 %v742, %v963
        %v1042 = vadd.f32 %v744, %v965
        %v1043 = vadd.f32 %v748, %v969
        %v1044 = vadd.f32 %v750, %v971
        %v1045 = vadd.f32 %v754, %v975
        %v1046 = vadd.f32 %v756, %v977
        %v1047 = vadd.f32 %v760, %v981
        %v1048 = vadd.f32 %v762, %v983
        %v1049 = vadd.f32 %v766, %v987
        %v1050 = vadd.f32 %v768, %v989
        %v1051 = vadd.f32 %v772, %v993
        %v1052 = vadd.f32 %v774, %v995
        %v1053 = vadd.f32 %v778, %v999
        %v1054 = vadd.f32 %v780, %v1001
        %v1055 = vadd.f32 %v784, %v1005
        %v1056 = vadd.f32 %v786, %v1007
        %v1057 = vadd.f32 %v790, %v1011
        %v1058 = vadd.f32 %v792, %v1013
        %v1059 = vadd.f32 %v796, %v1017
        %v1060 = vadd.f32 %v798, %v1019
        %v1061 = vadd.f32 %v802, %v1023
        %v1062 = vadd.f32 %v804, %v1025
        %v1063 = vadd.f32 %v808, %v1029
        %v1064 = vadd.f32 %v810, %v1031
        %v1065 = vmax.f32 %v1033, 0.0
        %v1066 = vmax.f32 %v1034, 0.0
        %v1067 = vmax.f32 %v1035, 0.0
        %v1068 = vmax.f32 %v1036, 0.0
        %v1069 = vmax.f32 %v1037, 0.0
        %v1070 = vmax.f32 %v1038, 0.0
        %v1071 = vmax.f32 %v1039, 0.0
        %v1072 = vmax.f32 %v1040, 0.0
        %v1073 = vmax.f32 %v1041, 0.0
        %v1074 = vmax.f32 %v1042, 0.0
        %v1075 = vmax.f32 %v1043, 0.0
        %v1076 = vmax.f32 %v1044, 0.0
        %v1077 = vmax.f32 %v1045, 0.0
        %v1078 = vmax.f32 %v1046, 0.0
        %v1079 = vmax.f32 %v1047, 0.0
        %v1080 = vmax.f32 %v1048, 0.0
        %v1081 = vmax.f32 %v1049, 0.0
        %v1082 = vmax.f32 %v1050, 0.0
        %v1083 = vmax.f32 %v1051, 0.0
        %v1084 = vmax.f32 %v1052, 0.0
        %v1085 = vmax.f32 %v1053, 0.0
        %v1086 = vmax.f32 %v1054, 0.0
        %v1087 = vmax.f32 %v1055, 0.0
        %v1088 = vmax.f32 %v1056, 0.0
        %v1089 = vmax.f32 %v1057, 0.0
        %v1090 = vmax.f32 %v1058, 0.0
        %v1091 = vmax.f32 %v1059, 0.0
        %v1092 = vmax.f32 %v1060, 0.0
        %v1093 = vmax.f32 %v1061, 0.0
        %v1094 = vmax.f32 %v1062, 0.0
        %v1095 = vmax.f32 %v1063, 0.0
        %v1096 = vmax.f32 %v1064, 0.0
        %1097 = vst [vmem:[%s426] sm:$0xff] %v1065
        %1098 = vst [vmem:[%s426 + $0x8] sm:$0xff] %v1066
        %1099 = vst [vmem:[%s426 + $0x10] sm:$0xff] %v1067
        %1100 = vst [vmem:[%s426 + $0x18] sm:$0xff] %v1068
        %1101 = vst [vmem:[%s426 + $0x20] sm:$0xff] %v1069
        %1102 = vst [vmem:[%s426 + $0x28] sm:$0xff] %v1070
        %1103 = vst [vmem:[%s426 + $0x30] sm:$0xff] %v1071
        %1104 = vst [vmem:[%s426 + $0x38] sm:$0xff] %v1072
        %1105 = vst [vmem:[%s426 + $0x40] sm:$0xff] %v1073
        %1106 = vst [vmem:[%s426 + $0x48] sm:$0xff] %v1074
        %1107 = vst [vmem:[%s426 + $0x50] sm:$0xff] %v1075
        %1108 = vst [vmem:[%s426 + $0x58] sm:$0xff] %v1076
        %1109 = vst [vmem:[%s426 + $0x60] sm:$0xff] %v1077
        %1110 = vst [vmem:[%s426 + $0x68] sm:$0xff] %v1078
        %1111 = vst [vmem:[%s426 + $0x70] sm:$0xff] %v1079
        %1112 = vst [vmem:[%s426 + $0x78] sm:$0xff] %v1080
        %1113 = vst [vmem:[%s426 + $0x80] sm:$0xff] %v1081
        %1114 = vst [vmem:[%s426 + $0x88] sm:$0xff] %v1082
        %1115 = vst [vmem:[%s426 + $0x90] sm:$0xff] %v1083
        %1116 = vst [vmem:[%s426 + $0x98] sm:$0xff] %v1084
        %1117 = vst [vmem:[%s426 + $0xa0] sm:$0xff] %v1085
        %1118 = vst [vmem:[%s426 + $0xa8] sm:$0xff] %v1086
        %1119 = vst [vmem:[%s426 + $0xb0] sm:$0xff] %v1087
        %1120 = vst [vmem:[%s426 + $0xb8] sm:$0xff] %v1088
        %1121 = vst [vmem:[%s426 + $0xc0] sm:$0xff] %v1089
        %1122 = vst [vmem:[%s426 + $0xc8] sm:$0xff] %v1090
        %1123 = vst [vmem:[%s426 + $0xd0] sm:$0xff] %v1091
        %1124 = vst [vmem:[%s426 + $0xd8] sm:$0xff] %v1092
        %1125 = vst [vmem:[%s426 + $0xe0] sm:$0xff] %v1093
        %1126 = vst [vmem:[%s426 + $0xe8] sm:$0xff] %v1094
        %1127 = vst [vmem:[%s426 + $0xf0] sm:$0xff] %v1095
        %1128 = vst [vmem:[%s426 + $0xf8] sm:$0xff] %v1096
        %s1129 = sand.u32 %s218, 1
        %s1130 = scalar_lea.sflag [#allocation4], %s1129
        %s1131 = sand.u32 %s218, 1
        %s1132 = smul.addr %s1131, 256
        %s1133 = scalar_lea.vmem [#allocation11], %s1132
        // Predicated region
        $region69: #{tpu_custom_call.1} parent=47 // pred_check
          %p1134 = pneg %p228
        $region70: #{tpu_custom_call.1} parent=47 // pred_check_branch
          %1136 = sbr.rel (%p1134) target = $region72
        $region71: #{tpu_custom_call.1} parent=47 // pred_region
          %s1137 = smul.u32 16, %s35
          %s1139 = ssub.s32 4096, 4096
          %1140 = vsyncadd %s1130, %s1139
          %s1141 = smul.addr %s1137, 2
          %s1142 = smul.addr %s34, 32
          %s1143 = sadd.s32 %s1141, %s1142
          %s1144 = smul.addr %s1143, 128
          %s1145 = scalar_lea.hbm %s7, %s1144
          %s1146 = sshll.u32 %s1133, 4
          %s1147 = int_to_ptr.vmem [resolvable:$true] %s1146
          %1152 = dma.vmem_to_hbm [thread:$0]  %s1147, 4096, %s1145, %s1130, 256, 256, 16
        $region72: #{tpu_custom_call.1} parent=47 // pred_fallthru
          _
      $region48: #{tpu_custom_call.1} parent=5 // pred_fallthru
        _
      %p1153 = scmp.le.s32.totalorder 2, %s25
      // Predicated region
      $region73: #{tpu_custom_call.1} parent=5 // pred_check
        %p1154 = pneg %p1153
      $region74: #{tpu_custom_call.1} parent=5 // pred_check_branch
        %1156 = sbr.rel (%p1154) target = $region76
      $region75: #{tpu_custom_call.1} parent=5 // pred_region
        %s1157 = ssub.s32 %s25, 2
        // Predicated region
        $region77: #{tpu_custom_call.1} parent=75 // pred_check
          %p1158 = pneg %p234
        $region78: #{tpu_custom_call.1} parent=75 // pred_check_branch
          %1160 = sbr.rel (%p1158) target = $region80
        $region79: #{tpu_custom_call.1} parent=75 // pred_region
          %s1161 = sand.u32 %s219, 1
          %s1162 = scalar_lea.sflag [#allocation4], %s1161
          %s1163 = sand.u32 %s219, 1
          %s1164 = smul.addr %s1163, 256
          %s1165 = scalar_lea.vmem [#allocation11], %s1164
          %1166 = dma.done %s1162, 4096
        $region80: #{tpu_custom_call.1} parent=75 // pred_fallthru
          _
      $region76: #{tpu_custom_call.1} parent=5 // pred_fallthru
        _
    $region6: #{tpu_custom_call.1} parent=1 // loop_footer
      %s29 = sadd.s32 1, %s25
    $region7: #{tpu_custom_call.1} parent=1 // loop_footer_branch
      %24 = sbr.rel target = $region3
    $region8: #{tpu_custom_call.1} parent=1 // loop_exit
      _
    %1167 = vsyncpa [#allocation3], 1
    %s1168 = scalar_lea.sflag [#allocation3], 1
    %1169 = vsyncpa %s1168, 1
    %1170 = vsyncpa [#allocation6], 1
    %s1171 = scalar_lea.sflag [#allocation6], 1
    %1172 = vsyncpa %s1171, 1
    %1173 = vsyncpa [#allocation9], 1
    %s1174 = scalar_lea.sflag [#allocation9], 1
    %1175 = vsyncpa %s1174, 1
    %1176 = vsyncpa [#allocation4], 1
    %s1177 = scalar_lea.sflag [#allocation4], 1
    %1178 = vsyncpa %s1177, 1

</llo_original>
